<compile_context>
chip_gen: v7x
topology: tpu7x:2x2x1
jax: 0.10.0
libtpu: 0.0.40
codegen_flags: <defaults>
</compile_context>

<pallas_src>
import math

import jax
import jax.numpy as jnp
from jax import lax
from jax.experimental import pallas as pl
from jax.experimental.pallas import tpu as pltpu

# ---- small, module-consistent shapes ----
B = 2
C = 8                   # residual_channels
TWO_C = 2 * C
T = 64                  # sequence length
BT = B * T              # 128 -> exactly one full lane group
N_MELS = 16
N_COND_G = 8            # n_cond_global
DIFF_DIM = 512          # diffusion embedding dim (Linear(512, residual_channels))
DILATION = 2
KSIZE = 3
SEQ_ROWS = C + C + C + N_MELS + N_COND_G       # 48: x, diff, glot, cond, condg
STACK = 3 * C + C + N_MELS + N_COND_G          # 56: real contraction rows (no bias row)
SLAB_ROWS = 64                                 # 56 real rows + 8 "ones" rows (bias fold)
W2_COLS = 2 * C                                # 16: [w_out | b_out | zeros]
INV_SQRT2 = 1.0 / math.sqrt(2.0)

# bf16 MXU operands (f32 accumulate) are a modest serial-path win on v6e/v7x; default off
# so results match the f32 reference to ~1e-5 and the kernel stays optimal on v5e.
USE_BF16_MXU = False

assert DILATION < T, "zero-pad masking of the rolled taps requires DILATION < T"
assert BT == 128 and SEQ_ROWS % 8 == 0


def residual_block_kernel(seq_ref, w_ref, out_ref, slab_ref):
    """Fused ResidualBlock forward.

    seq_ref  (48,128): rows 0:8 x, 8:16 diff, 16:24 glot, 24:40 cond, 40:48 condg
    w_ref    (32,128): rows 0:16  -> w1 = [w_dil0|w_dil1|w_dil2|w_glot|w_cond|w_condg|b_total|0] (cols 0:64)
                       rows 16:32 -> w2 = [w_out|b_out|0]                                        (cols 0:16)
    out_ref  (16,128): rows 0:8 residual, 8:16 skip
    slab_ref (64,128): scratch activation slab; rows 56:64 hold ones (bias rows)
    """
    x = seq_ref[0:C, :]
    y = x + seq_ref[C:2 * C, :]                       # + diffusion projection (precomputed)

    # dilated k=3 taps; lane l = b*T + t, so mask prevents cross-batch leakage
    t_local = lax.broadcasted_iota(jnp.int32, (C, BT), 1) % T
    y_m = jnp.where(t_local >= DILATION,
                    pltpu.roll(y, shift=DILATION, axis=1), 0.0)        # y[:, t-DIL]
    y_p = jnp.where(t_local < T - DILATION,
                    pltpu.roll(y, shift=BT - DILATION, axis=1), 0.0)   # y[:, t+DIL]

    # build the (64,128) activation slab with static-slice stores (no concatenate)
    slab_ref[0:C, :] = y_m
    slab_ref[C:2 * C, :] = y
    slab_ref[2 * C:3 * C, :] = y_p
    slab_ref[3 * C:STACK, :] = seq_ref[2 * C:SEQ_ROWS, :]              # glot, cond, condg
    slab_ref[STACK:, :] = jnp.ones((SLAB_ROWS - STACK, BT), jnp.float32)   # bias rows

    # fused projection: dilated conv (3 taps) + glot + mel + global + all biases -> 1 matmul
    w1 = w_ref[0:TWO_C, 0:SLAB_ROWS]                                   # (16, 64)
    slab = slab_ref[...]
    if USE_BF16_MXU:
        w1 = w1.astype(jnp.bfloat16)
        slab = slab.astype(jnp.bfloat16)
    acc = jnp.dot(w1, slab, preferred_element_type=jnp.float32)        # (16, 128)

    # gated activation (kept f32 on the VPU/EUP)
    z = jax.nn.sigmoid(acc[0:C, :]) * jnp.tanh(acc[C:, :])             # (8, 128)

    # output_projection: reuse scratch rows 48:64 as [z ; ones] so b_out folds into the MXU
    slab_ref[STACK - C:STACK, :] = z
    w2 = w_ref[TWO_C:, 0:W2_COLS]                                      # (16, 16)
    zin = slab_ref[STACK - C:, :]                                      # (16, 128)
    if USE_BF16_MXU:
        w2 = w2.astype(jnp.bfloat16)
        zin = zin.astype(jnp.bfloat16)
    y_out = jnp.dot(w2, zin, preferred_element_type=jnp.float32)       # (16, 128)

    out_ref[0:C, :] = ((x + y_out[0:C, :]) * INV_SQRT2).astype(out_ref.dtype)
    out_ref[C:, :] = y_out[C:, :].astype(out_ref.dtype)


def _fold(a):
    """(B, Cc, T) -> (Cc, B*T) lane-dense slab."""
    return jnp.transpose(a, (1, 0, 2)).reshape(a.shape[1], BT)


def _unfold(a):
    """(Cc, B*T) -> (B, Cc, T)."""
    return jnp.transpose(a.reshape(a.shape[0], B, T), (1, 0, 2))


def residual_block_pallas(x, glot, cond, condg, diffusion_step, p):
    # diffusion_projection: per-(B, C), independent of T -> plain XLA, hoisted out.
    diff = diffusion_step @ p["w_diff"].T + p["b_diff"][:, 0]                    # (B, C)
    diff_f = jnp.broadcast_to(diff.T[:, :, None], (C, B, T)).reshape(C, BT)

    # ONE lane-dense activation slab (48, 128): x, diff, glot, cond, condg
    seq_slab = jnp.concatenate(
        [_fold(x), diff_f, _fold(glot), _fold(cond), _fold(condg)], axis=0)

    # ONE weight slab (32, 128); biases folded in as extra matmul columns.
    b_total = p["b_dil"] + p["b_glot"] + p["b_cond"] + p["b_condg"]              # (2C, 1)
    w1 = jnp.concatenate(
        [p["w_dil"][0], p["w_dil"][1], p["w_dil"][2],
         p["w_glot"], p["w_cond"], p["w_condg"], b_total,
         jnp.zeros((TWO_C, SLAB_ROWS - STACK - 1), jnp.float32)], axis=1)        # (16, 64)
    w2 = jnp.concatenate(
        [p["w_out"], p["b_out"],
         jnp.zeros((TWO_C, W2_COLS - C - 1), jnp.float32)], axis=1)              # (16, 16)
    w_slab = jnp.concatenate(
        [jnp.pad(w1, ((0, 0), (0, BT - SLAB_ROWS))),
         jnp.pad(w2, ((0, 0), (0, BT - W2_COLS)))], axis=0)                      # (32, 128)

    # No grid: single invocation, whole arrays resident in VMEM (<40 KiB total).
    out = pl.pallas_call(
        residual_block_kernel,
        out_shape=jax.ShapeDtypeStruct((TWO_C, BT), jnp.float32),
        in_specs=[pl.BlockSpec(memory_space=pltpu.MemorySpace.VMEM),
                  pl.BlockSpec(memory_space=pltpu.MemorySpace.VMEM)],
        out_specs=pl.BlockSpec(memory_space=pltpu.MemorySpace.VMEM),
        scratch_shapes=[pltpu.VMEM((SLAB_ROWS, BT), jnp.float32)],
    )(seq_slab, w_slab)

    return _unfold(out[:C, :]), _unfold(out[C:, :])


def residual_block_reference(x, glot, cond, condg, diffusion_step, p):
    """Pure-JAX reference mirroring the PyTorch forward."""
    diff = diffusion_step @ p["w_diff"].T + p["b_diff"][:, 0]      # (B, C)
    y = x + diff[:, :, None]
    ypad = jnp.pad(y, ((0, 0), (0, 0), (DILATION, DILATION)))
    acc = jnp.broadcast_to(p["b_dil"][None], (B, TWO_C, T))
    for k in range(KSIZE):
        win = ypad[:, :, k * DILATION:k * DILATION + T]
        acc = acc + jnp.einsum("oi,bit->bot", p["w_dil"][k], win)
    acc = acc + jnp.einsum("oi,bit->bot", p["w_glot"], glot) + p["b_glot"][None]
    acc = acc + jnp.einsum("oi,bit->bot", p["w_cond"], cond) + p["b_cond"][None]
    acc = acc + jnp.einsum("oi,bit->bot", p["w_condg"], condg) + p["b_condg"][None]
    gate, filt = acc[:, :C], acc[:, C:]
    z = jax.nn.sigmoid(gate) * jnp.tanh(filt)
    y_out = jnp.einsum("oi,bit->bot", p["w_out"], z) + p["b_out"][None]
    residual, skip = y_out[:, :C], y_out[:, C:]
    return (x + residual) / math.sqrt(2.0), skip


def make_params(key):
    ks = jax.random.split(key, 12)

    def kaiming(k, shape, fan_in):
        return (jax.random.normal(k, shape) * math.sqrt(2.0 / fan_in)).astype(jnp.float32)

    def small(k, shape):
        return (jax.random.normal(k, shape) * 0.02).astype(jnp.float32)

    return {
        # diffusion_projection = Linear(512, C)
        "w_diff": (jax.random.normal(ks[0], (C, DIFF_DIM)) / math.sqrt(DIFF_DIM)).astype(jnp.float32),
        "b_diff": small(ks[1], (C, 1)),
        # dilated_conv = Conv1d(C, 2C, 3, padding=dil, dilation=dil); weight stored as (K, 2C, C)
        "w_dil": kaiming(ks[2], (KSIZE, TWO_C, C), C * KSIZE),
        "b_dil": small(ks[3], (TWO_C, 1)),
        # glot_projection = Conv1d(C, 2C, 1)
        "w_glot": kaiming(ks[4], (TWO_C, C), C),
        "b_glot": small(ks[5], (TWO_C, 1)),
        # conditioner_projection = Conv1d(n_mels, 2C, 1)
        "w_cond": kaiming(ks[6], (TWO_C, N_MELS), N_MELS),
        "b_cond": small(ks[7], (TWO_C, 1)),
        # conditioner_projection_global = Conv1d(n_cond_global, 2C, 1)
        "w_condg": kaiming(ks[8], (TWO_C, N_COND_G), N_COND_G),
        "b_condg": small(ks[9], (TWO_C, 1)),
        # output_projection = Conv1d(C, 2C, 1)
        "w_out": kaiming(ks[10], (TWO_C, C), C),
        "b_out": small(ks[11], (TWO_C, 1)),
    }


if __name__ == "__main__":
    key = jax.random.PRNGKey(0)
    k_par, k_x, k_g, k_c, k_cg, k_d = jax.random.split(key, 6)

    params = make_params(k_par)
    x = jax.random.normal(k_x, (B, C, T), dtype=jnp.float32)
    glot = jax.random.normal(k_g, (B, C, T), dtype=jnp.float32)
    conditioner = jax.random.normal(k_c, (B, N_MELS, T), dtype=jnp.float32)
    conditioner_global = jax.random.normal(k_cg, (B, N_COND_G, T), dtype=jnp.float32)
    diffusion_step = jax.random.normal(k_d, (B, DIFF_DIM), dtype=jnp.float32)

    out_res, out_skip = residual_block_pallas(
        x, glot, conditioner, conditioner_global, diffusion_step, params)
    jax.block_until_ready(out_res)
    jax.block_until_ready(out_skip)

    ref_res, ref_skip = residual_block_reference(
        x, glot, conditioner, conditioner_global, diffusion_step, params)

    tol = 2e-2 if USE_BF16_MXU else 1e-4
    assert out_res.shape == (B, C, T) and out_skip.shape == (B, C, T)
    assert jnp.allclose(out_res, ref_res, rtol=tol, atol=tol), "residual mismatch"
    assert jnp.allclose(out_skip, ref_skip, rtol=tol, atol=tol), "skip mismatch"

    print("KERNEL_OK")
</pallas_src>

<mosaic_0001>
module attributes {stable_mosaic.version = 11 : i64} {
  func.func @residual_block_kernel(%arg0: memref<48x128xf32, #tpu.memory_space<vmem>>, %arg1: memref<32x128xf32, #tpu.memory_space<vmem>>, %arg2: memref<16x128xf32, #tpu.memory_space<vmem>>, %arg3: memref<64x128xf32, #tpu.memory_space<vmem>>) attributes {dimension_semantics = [], scalar_prefetch = 0 : i64, scratch_operands = 1 : i64, tpu.core_type = #tpu.core_type<tc>} {
    %c0 = arith.constant 0 : index
    %c0_0 = arith.constant 0 : index
    %0 = vector.load %arg0[%c0, %c0_0] : memref<48x128xf32, #tpu.memory_space<vmem>>, vector<8x128xf32>
    %c8 = arith.constant 8 : index
    %c0_1 = arith.constant 0 : index
    %1 = vector.load %arg0[%c8, %c0_1] : memref<48x128xf32, #tpu.memory_space<vmem>>, vector<8x128xf32>
    %2 = arith.addf %0, %1 : vector<8x128xf32>
    %3 = tpu.iota {dimensions = array<i32: 1>} : vector<8x128xi32>
    %c64_i32 = arith.constant 64 : i32
    %c0_i32 = arith.constant 0 : i32
    %4 = arith.cmpi eq, %c64_i32, %c0_i32 : i32
    %c1_i32 = arith.constant 1 : i32
    %5 = arith.select %4, %c1_i32, %c64_i32 : i32
    %6 = vector.broadcast %5 : i32 to vector<8x128xi32>
    %7 = arith.remsi %3, %6 : vector<8x128xi32>
    %c0_i32_2 = arith.constant 0 : i32
    %8 = vector.broadcast %c0_i32_2 : i32 to vector<8x128xi32>
    %9 = arith.cmpi ne, %7, %8 : vector<8x128xi32>
    %c0_i32_3 = arith.constant 0 : i32
    %10 = vector.broadcast %c0_i32_3 : i32 to vector<8x128xi32>
    %11 = arith.cmpi slt, %7, %10 : vector<8x128xi32>
    %c0_i32_4 = arith.constant 0 : i32
    %12 = arith.cmpi slt, %5, %c0_i32_4 : i32
    %13 = vector.broadcast %12 : i1 to vector<8x128xi1>
    %14 = vector.broadcast %13 : vector<8x128xi1> to vector<8x128xi1>
    %15 = arith.xori %11, %14 : vector<8x128xi1>
    %16 = arith.andi %15, %9 : vector<8x128xi1>
    %17 = vector.broadcast %5 : i32 to vector<8x128xi32>
    %18 = arith.addi %7, %17 : vector<8x128xi32>
    %19 = arith.select %16, %18, %7 : vector<8x128xi1>, vector<8x128xi32>
    %c2_i32 = arith.constant 2 : i32
    %20 = vector.broadcast %c2_i32 : i32 to vector<8x128xi32>
    %21 = arith.cmpi sge, %19, %20 : vector<8x128xi32>
    %c2_i32_5 = arith.constant 2 : i32
    %22 = tpu.dynamic_rotate %2 by %c2_i32_5 dim 1 : vector<8x128xf32>, i32 -> vector<8x128xf32>
    %cst = arith.constant 0.000000e+00 : f32
    %23 = vector.broadcast %cst : f32 to vector<8x128xf32>
    %24 = arith.select %21, %22, %23 : vector<8x128xi1>, vector<8x128xf32>
    %c62_i32 = arith.constant 62 : i32
    %25 = vector.broadcast %c62_i32 : i32 to vector<8x128xi32>
    %26 = arith.cmpi slt, %19, %25 : vector<8x128xi32>
    %c126_i32 = arith.constant 126 : i32
    %27 = tpu.dynamic_rotate %2 by %c126_i32 dim 1 : vector<8x128xf32>, i32 -> vector<8x128xf32>
    %cst_6 = arith.constant 0.000000e+00 : f32
    %28 = vector.broadcast %cst_6 : f32 to vector<8x128xf32>
    %29 = arith.select %26, %27, %28 : vector<8x128xi1>, vector<8x128xf32>
    %c0_7 = arith.constant 0 : index
    %c0_8 = arith.constant 0 : index
    %30 = vector.load %arg3[%c0_7, %c0_8] : memref<64x128xf32, #tpu.memory_space<vmem>>, vector<8x128xf32>
    tpu.vector_store %arg3[%c0_7, %c0_8], %24 {strides = array<i32>} : memref<64x128xf32, #tpu.memory_space<vmem>>, vector<8x128xf32>,
    %c8_9 = arith.constant 8 : index
    %c0_10 = arith.constant 0 : index
    %31 = vector.load %arg3[%c8_9, %c0_10] : memref<64x128xf32, #tpu.memory_space<vmem>>, vector<8x128xf32>
    tpu.vector_store %arg3[%c8_9, %c0_10], %2 {strides = array<i32>} : memref<64x128xf32, #tpu.memory_space<vmem>>, vector<8x128xf32>,
    %c16 = arith.constant 16 : index
    %c0_11 = arith.constant 0 : index
    %32 = vector.load %arg3[%c16, %c0_11] : memref<64x128xf32, #tpu.memory_space<vmem>>, vector<8x128xf32>
    tpu.vector_store %arg3[%c16, %c0_11], %29 {strides = array<i32>} : memref<64x128xf32, #tpu.memory_space<vmem>>, vector<8x128xf32>,
    %c16_12 = arith.constant 16 : index
    %c0_13 = arith.constant 0 : index
    %33 = vector.load %arg0[%c16_12, %c0_13] : memref<48x128xf32, #tpu.memory_space<vmem>>, vector<32x128xf32>
    %c24 = arith.constant 24 : index
    %c0_14 = arith.constant 0 : index
    %34 = vector.load %arg3[%c24, %c0_14] : memref<64x128xf32, #tpu.memory_space<vmem>>, vector<32x128xf32>
    tpu.vector_store %arg3[%c24, %c0_14], %33 {strides = array<i32>} : memref<64x128xf32, #tpu.memory_space<vmem>>, vector<32x128xf32>,
    %cst_15 = arith.constant 1.000000e+00 : f32
    %35 = vector.broadcast %cst_15 : f32 to vector<8x128xf32>
    %c56 = arith.constant 56 : index
    %c0_16 = arith.constant 0 : index
    %36 = vector.load %arg3[%c56, %c0_16] : memref<64x128xf32, #tpu.memory_space<vmem>>, vector<8x128xf32>
    tpu.vector_store %arg3[%c56, %c0_16], %35 {strides = array<i32>} : memref<64x128xf32, #tpu.memory_space<vmem>>, vector<8x128xf32>,
    %c0_17 = arith.constant 0 : index
    %c0_18 = arith.constant 0 : index
    %37 = vector.load %arg1[%c0_17, %c0_18] : memref<32x128xf32, #tpu.memory_space<vmem>>, vector<16x64xf32>
    %c0_19 = arith.constant 0 : index
    %c0_20 = arith.constant 0 : index
    %38 = vector.load %arg3[%c0_19, %c0_20] : memref<64x128xf32, #tpu.memory_space<vmem>>, vector<64x128xf32>
    %cst_21 = arith.constant dense<0.000000e+00> : vector<16x128xf32>
    %39 = tpu.matmul %37, %38, %cst_21 {dimension_numbers = #tpu.dot_dimension_numbers<[1], [0], [0], [1], [0, 0, 1, 1], [], []>} : vector<16x64xf32>, vector<64x128xf32>, vector<16x128xf32> -> vector<16x128xf32>
    %40 = vector.extract_strided_slice %39 {offsets = [0, 0], sizes = [8, 128], strides = [1, 1]} : vector<16x128xf32> to vector<8x128xf32>
    %41 = arith.negf %40 : vector<8x128xf32>
    %42 = math.exp %41 : vector<8x128xf32>
    %cst_22 = arith.constant 1.000000e+00 : f32
    %43 = vector.broadcast %cst_22 : f32 to vector<8x128xf32>
    %44 = arith.addf %43, %42 : vector<8x128xf32>
    %45 = arith.divf %43, %44 : vector<8x128xf32>
    %46 = vector.extract_strided_slice %39 {offsets = [8, 0], sizes = [8, 128], strides = [1, 1]} : vector<16x128xf32> to vector<8x128xf32>
    %47 = math.tanh %46 : vector<8x128xf32>
    %48 = arith.mulf %45, %47 : vector<8x128xf32>
    %c48 = arith.constant 48 : index
    %c0_23 = arith.constant 0 : index
    %49 = vector.load %arg3[%c48, %c0_23] : memref<64x128xf32, #tpu.memory_space<vmem>>, vector<8x128xf32>
    tpu.vector_store %arg3[%c48, %c0_23], %48 {strides = array<i32>} : memref<64x128xf32, #tpu.memory_space<vmem>>, vector<8x128xf32>,
    %c16_24 = arith.constant 16 : index
    %c0_25 = arith.constant 0 : index
    %50 = vector.load %arg1[%c16_24, %c0_25] : memref<32x128xf32, #tpu.memory_space<vmem>>, vector<16x16xf32>
    %c48_26 = arith.constant 48 : index
    %c0_27 = arith.constant 0 : index
    %51 = vector.load %arg3[%c48_26, %c0_27] : memref<64x128xf32, #tpu.memory_space<vmem>>, vector<16x128xf32>
    %cst_28 = arith.constant dense<0.000000e+00> : vector<16x128xf32>
    %52 = tpu.matmul %50, %51, %cst_28 {dimension_numbers = #tpu.dot_dimension_numbers<[1], [0], [0], [1], [0, 0, 1, 1], [], []>} : vector<16x16xf32>, vector<16x128xf32>, vector<16x128xf32> -> vector<16x128xf32>
    %53 = vector.extract_strided_slice %52 {offsets = [0, 0], sizes = [8, 128], strides = [1, 1]} : vector<16x128xf32> to vector<8x128xf32>
    %54 = arith.addf %0, %53 : vector<8x128xf32>
    %cst_29 = arith.constant 0.707106769 : f32
    %55 = vector.broadcast %cst_29 : f32 to vector<8x128xf32>
    %56 = arith.mulf %54, %55 : vector<8x128xf32>
    %c0_30 = arith.constant 0 : index
    %c0_31 = arith.constant 0 : index
    %57 = vector.load %arg2[%c0_30, %c0_31] : memref<16x128xf32, #tpu.memory_space<vmem>>, vector<8x128xf32>
    tpu.vector_store %arg2[%c0_30, %c0_31], %56 {strides = array<i32>} : memref<16x128xf32, #tpu.memory_space<vmem>>, vector<8x128xf32>,
    %58 = vector.extract_strided_slice %52 {offsets = [8, 0], sizes = [8, 128], strides = [1, 1]} : vector<16x128xf32> to vector<8x128xf32>
    %c8_32 = arith.constant 8 : index
    %c0_33 = arith.constant 0 : index
    %59 = vector.load %arg2[%c8_32, %c0_33] : memref<16x128xf32, #tpu.memory_space<vmem>>, vector<8x128xf32>
    tpu.vector_store %arg2[%c8_32, %c0_33], %58 {strides = array<i32>} : memref<16x128xf32, #tpu.memory_space<vmem>>, vector<8x128xf32>,
    return
  }
}

</mosaic_0001>

<llo_original>
// kernel: tpu_custom_call.1
$region0: #{tpu_custom_call.1}
  #allocation0 [shape = 'u32[]', space=smem, size = 0x4, offset = 0x4, fixed_abs, tag = 'smem constant byte address 0x4 - core index']
  #allocation1 [shape = 'u32[144,128]{1,0:T(1,128)}', space=vmem, size = 0x12000, scoped, tag = 'internal scratch']
  #allocation2 [shape = 'f32[64,128]{1,0:T(8,128)}', space=vmem, size = 0x8000, scoped, tag = 'scratch operand']
  %s0 = inlined_call_operand.hbm [shape: f32[48,128], index: 0, kind: input, shape index: {}]
  %s1 = inlined_call_operand.hbm [shape: f32[32,128], index: 1, kind: input, shape index: {}]
  %s2 = inlined_call_operand.hbm [shape: f32[16,128], index: 2, kind: output, shape index: {}]
  %s3 = sld [smem:[#allocation0]]
  $region26: #{tpu_custom_call.1} parent=0
    _
  %s5 = ssub.s32 1, %s3
  %s6 = scalar_select 0, %s5, %s3
  $region1: #{tpu_custom_call.1} parent=0
    #allocation3 [shape = 'u8[24576]{0}', space=vmem, size = 0x6000, scoped, tag = 'input window, operand 0, single buffered']
    #allocation4 [shape = 's32[1]{0}', space=sflag, size = 0x4, scoped, tag = 'scoped memory for tpu_custom_call.1']
    #allocation5 [shape = 's32[1]{0}', space=sflag, size = 0x4, scoped, tag = 'scoped memory for tpu_custom_call.1']
    #allocation6 [shape = 'u8[16384]{0}', space=vmem, size = 0x4000, scoped, tag = 'input window, operand 1, single buffered']
    #allocation7 [shape = 's32[1]{0}', space=sflag, size = 0x4, scoped, tag = 'scoped memory for tpu_custom_call.1']
    #allocation8 [shape = 'u8[8192]{0}', space=vmem, size = 0x2000, scoped, tag = 'output window, operand 0, single buffered']
    %7 = vsyncpa [#allocation4], 0
    %8 = vsyncpa [#allocation7], 0
    %9 = vsyncpa [#allocation5], 0
    // Predicated region
    $region2: #{tpu_custom_call.1} parent=1 // pred_check
      _
    $region3: #{tpu_custom_call.1} parent=1 // pred_check_branch
      %11 = sbr.rel (0) target = $region5
    $region4: #{tpu_custom_call.1} parent=1 // pred_region
      %s13 = ssub.s32 768, 768
      %14 = vsyncadd [#allocation4], %s13
      %s15 = sshll.u32 [#allocation3], 4
      %s16 = int_to_ptr.vmem [resolvable:$true] %s15
      %21 = dma.hbm_to_vmem [thread:$0]  %s0, 768, %s16, [#allocation4], 128, 128, 8
    $region5: #{tpu_custom_call.1} parent=1 // pred_fallthru
      _
    // Predicated region
    $region6: #{tpu_custom_call.1} parent=1 // pred_check
      _
    $region7: #{tpu_custom_call.1} parent=1 // pred_check_branch
      %23 = sbr.rel (0) target = $region9
    $region8: #{tpu_custom_call.1} parent=1 // pred_region
      %s25 = ssub.s32 512, 512
      %26 = vsyncadd [#allocation7], %s25
      %s27 = sshll.u32 [#allocation6], 4
      %s28 = int_to_ptr.vmem [resolvable:$true] %s27
      %33 = dma.hbm_to_vmem [thread:$0]  %s1, 512, %s28, [#allocation7], 128, 128, 8
    $region9: #{tpu_custom_call.1} parent=1 // pred_fallthru
      _
    // Predicated region
    $region10: #{tpu_custom_call.1} parent=1 // pred_check
      _
    $region11: #{tpu_custom_call.1} parent=1 // pred_check_branch
      %35 = sbr.rel (0) target = $region13
    $region12: #{tpu_custom_call.1} parent=1 // pred_region
      %36 = dma.done [#allocation4], 768
    $region13: #{tpu_custom_call.1} parent=1 // pred_fallthru
      _
    // Predicated region
    $region14: #{tpu_custom_call.1} parent=1 // pred_check
      _
    $region15: #{tpu_custom_call.1} parent=1 // pred_check_branch
      %38 = sbr.rel (0) target = $region17
    $region16: #{tpu_custom_call.1} parent=1 // pred_region
      %39 = dma.done [#allocation7], 512
    $region17: #{tpu_custom_call.1} parent=1 // pred_fallthru
      _
    %v40 = vld [vmem:[#allocation3] sm:$0xff]
    %v41 = vld [vmem:[#allocation3 + $0x8] sm:$0xff]
    %v42 = vadd.f32 %v40, %v41
    %v43 = vlaneseq
    %v44 = vand.u32 %v43, 127
    %vm45 = vcmp.lt.s32.totalorder %v44, 0
    %v46 = vsub.s32 0, %v44
    %v47 = vsel %vm45, %v46, %v44
    %v48 = vshrl.u32 %v47, 6
    %v49 = vand.u32 %v47, 63
    %v50 = vsub.s32 0, %v49
    %v51 = vsel %vm45, %v50, %v49
    %vm52 = vcmp.ne.s32.totalorder %v51, 0
    %vm53 = vcmp.lt.s32.totalorder %v51, 0
    %vm54 = vmand %vm53, %vm52
    %v55 = vadd.s32 %v51, 64
    %v56 = vsel %vm54, %v55, %v51
    %vm57 = vcmp.ge.s32.totalorder %v56, 2
    %58 = vrot.lane.b32.xlu0 %v42, 2
    %v59 = vpop.permute.xlu0 %58
    %v60 = vsel %vm57, %v59, 0.0
    %vm61 = vcmp.lt.s32.totalorder %v56, 62
    %62 = vrot.lane.b32.xlu0 %v42, 126
    %v63 = vpop.permute.xlu0 %62
    %v64 = vsel %vm61, %v63, 0.0
    %65 = vst [vmem:[#allocation2] sm:$0xff] %v60
    %66 = vst [vmem:[#allocation2 + $0x8] sm:$0xff] %v42
    %67 = vst [vmem:[#allocation2 + $0x10] sm:$0xff] %v64
    %v68 = vld [vmem:[#allocation3 + $0x10] sm:$0xff]
    %v69 = vld [vmem:[#allocation3 + $0x18] sm:$0xff]
    %v70 = vld [vmem:[#allocation3 + $0x20] sm:$0xff]
    %v71 = vld [vmem:[#allocation3 + $0x28] sm:$0xff]
    %72 = vst [vmem:[#allocation2 + $0x18] sm:$0xff] %v68
    %73 = vst [vmem:[#allocation2 + $0x20] sm:$0xff] %v69
    %74 = vst [vmem:[#allocation2 + $0x28] sm:$0xff] %v70
    %75 = vst [vmem:[#allocation2 + $0x30] sm:$0xff] %v71
    %76 = vst [vmem:[#allocation2 + $0x38] sm:$0xff] 1.0
    %v77 = vld [vmem:[#allocation6] sm:$0xff]
    %v78 = vld [vmem:[#allocation6 + $0x8] sm:$0xff]
    %v79 = vld [vmem:[#allocation2] sm:$0xff]
    %v80 = vld [vmem:[#allocation2 + $0x8] sm:$0xff]
    %v81 = vld [vmem:[#allocation2 + $0x10] sm:$0xff]
    %v82 = vld [vmem:[#allocation2 + $0x18] sm:$0xff]
    %v83 = vld [vmem:[#allocation2 + $0x20] sm:$0xff]
    %v84 = vld [vmem:[#allocation2 + $0x28] sm:$0xff]
    %v85 = vld [vmem:[#allocation2 + $0x30] sm:$0xff]
    %v86 = vld [vmem:[#allocation2 + $0x38] sm:$0xff]
    %vm87 = vcmask 523264
    %v89 = vsel %vm87, %v77, 0
    %v92 = vsel %vm87, %v78, 0
    %94 = vmatprep.subr.mxu0 0.0
    %95 = vmatpush1.msra.mxu0 %v79
    %96 = vmatprep.subr.mxu0 0.0
    %97 = vmatpush1.msra.mxu0 %v80
    %98 = vmatprep.subr.mxu0 0.0
    %99 = vmatpush1.msra.mxu0 %v81
    %100 = vmatprep.subr.mxu0 0.0
    %101 = vmatpush1.msra.mxu0 %v82
    %102 = vmatprep.subr.mxu0 0.0
    %103 = vmatpush1.msra.mxu0 %v83
    %104 = vmatprep.subr.mxu0 0.0
    %105 = vmatpush1.msra.mxu0 %v84
    %106 = vmatprep.subr.mxu0 0.0
    %107 = vmatpush1.msra.mxu0 %v85
    %108 = vmatprep.subr.mxu0 0.0
    %109 = vmatpush1.msra.mxu0 %v86
    %110 = vmatprep.subr.mxu0 0.0
    %111 = vmatpush1.msra.mxu0 0.0
    %112 = vmatprep.subr.mxu0 0.0
    %113 = vmatpush1.msra.mxu0 0.0
    %114 = vmatprep.subr.mxu0 0.0
    %115 = vmatpush1.msra.mxu0 0.0
    %116 = vmatprep.subr.mxu0 0.0
    %117 = vmatpush1.msra.mxu0 0.0
    %118 = vmatprep.subr.mxu0 0.0
    %119 = vmatpush1.msra.mxu0 0.0
    %120 = vmatprep.subr.mxu0 0.0
    %121 = vmatpush1.msra.mxu0 0.0
    %122 = vmatprep.subr.mxu0 0.0
    %123 = vmatpush1.msra.mxu0 0.0
    %124 = vmatprep.subr.mxu0 0.0
    %125 = vmatpush1.msra.mxu0 0.0
    %126 = vmatprep.subr.mxu0 0.0
    %127 = vmatpush1.msra.mxu0 0.0
    %128 = vmatprep.subr.mxu0 0.0
    %129 = vmatpush1.msra.mxu0 0.0
    %130 = vmatprep.subr.mxu0 0.0
    %131 = vmatpush1.msra.mxu0 0.0
    %132 = vmatprep.subr.mxu0 0.0
    %133 = vmatpush1.msra.mxu0 0.0
    %134 = vmatprep.subr.mxu0 0.0
    %135 = vmatpush1.msra.mxu0 0.0
    %136 = vmatprep.subr.mxu0 0.0
    %137 = vmatpush1.msra.mxu0 0.0
    %138 = vmatprep.subr.mxu0 0.0
    %139 = vmatpush1.msra.mxu0 0.0
    %140 = vmatprep.subr.mxu0 0.0
    %141 = vmatpush1.msra.mxu0 0.0
    %142 = vmatprep.subr.mxu0 0.0
    %143 = vmatpush1.msra.mxu0 0.0
    %144 = vmatprep.subr.mxu0 0.0
    %145 = vmatpush1.msra.mxu0 0.0
    %146 = vmatprep.subr.mxu0 0.0
    %147 = vmatpush1.msra.mxu0 0.0
    %148 = vmatprep.subr.mxu0 0.0
    %149 = vmatpush1.msra.mxu0 0.0
    %150 = vmatprep.subr.mxu0 0.0
    %151 = vmatpush1.msra.mxu0 0.0
    %152 = vmatprep.subr.mxu0 0.0
    %153 = vmatpush1.msra.mxu0 0.0
    %154 = vmatprep.subr.mxu0 0.0
    %155 = vmatpush1.msra.mxu0 0.0
    %156 = vmatprep.subr.mxu0 0.0
    %157 = vmatpush1.msra.mxu0 0.0
    %158 = vmatprep.mubr.f32.mxu0 0.0
    %159 = vmatmul.mubr.f32.gmra.mrb[0].mxu0 %v89
    %v160 = vpop.f32.mrb[0].mxu0
    %v161 = vadd.f32 0.0, %v160
    %v162 = vpop.f32.mrb[0].mxu0
    %163 = vmatprep.mubr.f32.mxu0 0.0
    %164 = vmatmul.mubr.f32.gmra.mrb[0].mxu0 %v92
    %v165 = vpop.f32.mrb[0].mxu0
    %v166 = vadd.f32 0.0, %v165
    %v167 = vpop.f32.mrb[0].mxu0
    %168 = vdwg.mxu0
    %v169 = vxor.u32 %v161, 2147483648
    %v170 = vmul.f32 %v169, 1.442695
    %v171 = vpow.pop %v170
    %v172 = vadd.f32 %v171, 1.0
    %v173 = vrcp.pop %v172
    %v174 = vmul.f32 1.0, %v173
    %v175 = vtanh.pop %v166
    %v176 = vmul.f32 %v174, %v175
    %177 = vst [vmem:[#allocation2 + $0x30] sm:$0xff] %v176
    %v178 = vld [vmem:[#allocation6 + $0x10] sm:$0xff]
    %v179 = vld [vmem:[#allocation6 + $0x18] sm:$0xff]
    %v180 = vld [vmem:[#allocation2 + $0x30] sm:$0xff]
    %v181 = vld [vmem:[#allocation2 + $0x38] sm:$0xff]
    %vm182 = vcmask 130048
    %v184 = vsel %vm182, %v178, 0
    %v187 = vsel %vm182, %v179, 0
    %189 = vmatprep.subr.mxu0 0.0
    %190 = vmatpush1.msra.mxu0 %v180
    %191 = vmatprep.subr.mxu0 0.0
    %192 = vmatpush1.msra.mxu0 %v181
    %193 = vmatprep.subr.mxu0 0.0
    %194 = vmatpush1.msra.mxu0 0.0
    %195 = vmatprep.subr.mxu0 0.0
    %196 = vmatpush1.msra.mxu0 0.0
    %197 = vmatprep.subr.mxu0 0.0
    %198 = vmatpush1.msra.mxu0 0.0
    %199 = vmatprep.subr.mxu0 0.0
    %200 = vmatpush1.msra.mxu0 0.0
    %201 = vmatprep.subr.mxu0 0.0
    %202 = vmatpush1.msra.mxu0 0.0
    %203 = vmatprep.subr.mxu0 0.0
    %204 = vmatpush1.msra.mxu0 0.0
    %205 = vmatprep.subr.mxu0 0.0
    %206 = vmatpush1.msra.mxu0 0.0
    %207 = vmatprep.subr.mxu0 0.0
    %208 = vmatpush1.msra.mxu0 0.0
    %209 = vmatprep.subr.mxu0 0.0
    %210 = vmatpush1.msra.mxu0 0.0
    %211 = vmatprep.subr.mxu0 0.0
    %212 = vmatpush1.msra.mxu0 0.0
    %213 = vmatprep.subr.mxu0 0.0
    %214 = vmatpush1.msra.mxu0 0.0
    %215 = vmatprep.subr.mxu0 0.0
    %216 = vmatpush1.msra.mxu0 0.0
    %217 = vmatprep.subr.mxu0 0.0
    %218 = vmatpush1.msra.mxu0 0.0
    %219 = vmatprep.subr.mxu0 0.0
    %220 = vmatpush1.msra.mxu0 0.0
    %221 = vmatprep.subr.mxu0 0.0
    %222 = vmatpush1.msra.mxu0 0.0
    %223 = vmatprep.subr.mxu0 0.0
    %224 = vmatpush1.msra.mxu0 0.0
    %225 = vmatprep.subr.mxu0 0.0
    %226 = vmatpush1.msra.mxu0 0.0
    %227 = vmatprep.subr.mxu0 0.0
    %228 = vmatpush1.msra.mxu0 0.0
    %229 = vmatprep.subr.mxu0 0.0
    %230 = vmatpush1.msra.mxu0 0.0
    %231 = vmatprep.subr.mxu0 0.0
    %232 = vmatpush1.msra.mxu0 0.0
    %233 = vmatprep.subr.mxu0 0.0
    %234 = vmatpush1.msra.mxu0 0.0
    %235 = vmatprep.subr.mxu0 0.0
    %236 = vmatpush1.msra.mxu0 0.0
    %237 = vmatprep.subr.mxu0 0.0
    %238 = vmatpush1.msra.mxu0 0.0
    %239 = vmatprep.subr.mxu0 0.0
    %240 = vmatpush1.msra.mxu0 0.0
    %241 = vmatprep.subr.mxu0 0.0
    %242 = vmatpush1.msra.mxu0 0.0
    %243 = vmatprep.subr.mxu0 0.0
    %244 = vmatpush1.msra.mxu0 0.0
    %245 = vmatprep.subr.mxu0 0.0
    %246 = vmatpush1.msra.mxu0 0.0
    %247 = vmatprep.subr.mxu0 0.0
    %248 = vmatpush1.msra.mxu0 0.0
    %249 = vmatprep.subr.mxu0 0.0
    %250 = vmatpush1.msra.mxu0 0.0
    %251 = vmatprep.subr.mxu0 0.0
    %252 = vmatpush1.msra.mxu0 0.0
    %253 = vmatprep.mubr.f32.mxu0 0.0
    %254 = vmatmul.mubr.f32.gmra.mrb[0].mxu0 %v184
    %v255 = vpop.f32.mrb[0].mxu0
    %v256 = vadd.f32 0.0, %v255
    %v257 = vpop.f32.mrb[0].mxu0
    %258 = vmatprep.mubr.f32.mxu0 0.0
    %259 = vmatmul.mubr.f32.gmra.mrb[0].mxu0 %v187
    %v260 = vpop.f32.mrb[0].mxu0
    %v261 = vadd.f32 0.0, %v260
    %v262 = vpop.f32.mrb[0].mxu0
    %263 = vdwg.mxu0
    %v264 = vadd.f32 %v40, %v256
    %v265 = vmul.f32 %v264, 0.70710677
    %266 = vst [vmem:[#allocation8] sm:$0xff] %v265
    %267 = vst [vmem:[#allocation8 + $0x8] sm:$0xff] %v261
    // Predicated region
    $region18: #{tpu_custom_call.1} parent=1 // pred_check
      _
    $region19: #{tpu_custom_call.1} parent=1 // pred_check_branch
      %269 = sbr.rel (0) target = $region21
    $region20: #{tpu_custom_call.1} parent=1 // pred_region
      %s271 = ssub.s32 256, 256
      %272 = vsyncadd [#allocation5], %s271
      %s273 = sshll.u32 [#allocation8], 4
      %s274 = int_to_ptr.vmem [resolvable:$true] %s273
      %279 = dma.vmem_to_hbm [thread:$0]  %s274, 256, %s2, [#allocation5], 128, 128, 8
    $region21: #{tpu_custom_call.1} parent=1 // pred_fallthru
      _
    // Predicated region
    $region22: #{tpu_custom_call.1} parent=1 // pred_check
      _
    $region23: #{tpu_custom_call.1} parent=1 // pred_check_branch
      %281 = sbr.rel (0) target = $region25
    $region24: #{tpu_custom_call.1} parent=1 // pred_region
      %282 = dma.done [#allocation5], 256
    $region25: #{tpu_custom_call.1} parent=1 // pred_fallthru
      _
    %283 = vsyncpa [#allocation4], 1
    %284 = vsyncpa [#allocation7], 1
    %285 = vsyncpa [#allocation5], 1

</llo_original>
